<compile_context>
chip_gen: v7x
topology: tpu7x:2x2x1
jax: 0.10.0
libtpu: 0.0.40
codegen_flags: <defaults>
</compile_context>

<pallas_src>
import functools

import jax
import jax.numpy as jnp
from jax.experimental import pallas as pl
from jax.experimental.pallas import tpu as pltpu

_LANES = 128


def _round_up(x, m):
    return ((x + m - 1) // m) * m


def _rope_lane_dense_kernel(offset_ref, params_ref, cos_ref, sin_ref, *, t_per_row):
    # offset_ref : SMEM (1,) int32        (scalar prefetch)
    # params_ref : VMEM (2, 128) f32      row0 = inv_freq[lane % d2]
    #                                     row1 = (lane // d2) * inv_freq[lane % d2]
    # cos_ref / sin_ref : VMEM (tile_r, 128), full-width unmasked stores
    tile_r = cos_ref.shape[0]
    row0 = pl.program_id(0) * tile_r
    offset = offset_ref[0]
    # exact int32 index math, single int->float conversion
    row_i = jax.lax.broadcasted_iota(jnp.int32, (tile_r, _LANES), 0) + row0
    base_t = row_i * t_per_row + offset
    inv_f = params_ref[0:1, :]
    phase0 = params_ref[1:2, :]
    freqs = base_t.astype(jnp.float32) * inv_f + phase0
    cos_ref[...] = jnp.cos(freqs).astype(cos_ref.dtype)
    sin_ref[...] = jnp.sin(freqs).astype(sin_ref.dtype)


def _rope_rowtile_kernel(offset_ref, inv_freq_ref, cos_ref, sin_ref):
    # Fallback when D/2 does not evenly divide 128 (rare rope_dim values) or
    # D/2 >= 128 (already lane-dense). Row-tiled straight (T, D2) layout.
    tile_t, d2 = cos_ref.shape
    t0 = pl.program_id(0) * tile_t
    offset = offset_ref[0]
    t_i = jax.lax.broadcasted_iota(jnp.int32, (tile_t, d2), 0) + t0 + offset
    freqs = t_i.astype(jnp.float32) * inv_freq_ref[...]
    cos_ref[...] = jnp.cos(freqs).astype(cos_ref.dtype)
    sin_ref[...] = jnp.sin(freqs).astype(sin_ref.dtype)


def make_rotary_embedding(config, *, row_tile=2048, out_dtype=jnp.float32):
    rope_dim = config["rope_dim"]
    rope_base = float(config["rope_base"])
    d2 = rope_dim // 2

    # deterministic buffer init (matches PyTorch __init__)
    inv_freq = 1.0 / rope_base ** (
        jnp.arange(0, rope_dim, 2, dtype=jnp.float32) / rope_dim
    )  # (D2,)

    lane_dense = (d2 <= _LANES) and (_LANES % d2 == 0)
    if lane_dense:
        t_per_row = _LANES // d2
        inv_freq_tiled = jnp.tile(inv_freq, t_per_row)                      # inv_freq[lane % d2]
        lane_t = (jnp.arange(_LANES, dtype=jnp.int32) // d2).astype(jnp.float32)
        phase0 = lane_t * inv_freq_tiled                                    # (lane//d2)*inv_freq
        params = jnp.stack([inv_freq_tiled, phase0], axis=0)                # (2, 128)
    else:
        inv_freq_row = inv_freq.reshape(1, d2)

    vmem_limit = 32 * 1024 * 1024  # explicit: v5e scoped default is only 16 MiB

    def forward(x, offset=0):
        B, H, T, _ = x.shape
        offset_arr = jnp.asarray([offset], dtype=jnp.int32)

        if lane_dense:
            rows = pl.cdiv(T, t_per_row)           # 128-lane rows in the slab
            rows_p = _round_up(rows, 8)            # sublane-aligned slab height
            # cap tile so the parallel grid has >= 2 blocks when possible
            # (both v7x TensorCores run); harmless on single-TC v5e/v6e.
            tile_r = max(8, min(row_tile, _round_up(pl.cdiv(rows_p, 2), 8)))
            grid = (pl.cdiv(rows_p, tile_r),)

            cos_slab, sin_slab = pl.pallas_call(
                functools.partial(_rope_lane_dense_kernel, t_per_row=t_per_row),
                out_shape=(
                    jax.ShapeDtypeStruct((rows_p, _LANES), out_dtype),
                    jax.ShapeDtypeStruct((rows_p, _LANES), out_dtype),
                ),
                grid_spec=pltpu.PrefetchScalarGridSpec(
                    num_scalar_prefetch=1,          # offset scalar -> SMEM
                    grid=grid,
                    in_specs=[
                        pl.BlockSpec((2, _LANES), lambda i, off: (0, 0)),  # params
                    ],
                    out_specs=(
                        pl.BlockSpec((tile_r, _LANES), lambda i, off: (i, 0)),
                        pl.BlockSpec((tile_r, _LANES), lambda i, off: (i, 0)),
                    ),
                ),
                compiler_params=pltpu.CompilerParams(
                    dimension_semantics=("parallel",),
                    vmem_limit_bytes=vmem_limit,
                ),
            )(offset_arr, params)

            # (rows_p, 128) -> (rows_p*t_per_row, d2) has an identical row-major
            # linear index: no-copy reshape. Only the [:T] slice touches data,
            # and only when T is not a multiple of t_per_row.
            cos2d = cos_slab.reshape(rows_p * t_per_row, d2)[:T]
            sin2d = sin_slab.reshape(rows_p * t_per_row, d2)[:T]
        else:
            # Row-tiled fallback: bounded VMEM for long T, parallel grid.
            # NOTE: d2 < 128 here still yields masked stores; acceptable for the
            # rare rope_dim values that hit this path.
            t_pad = _round_up(T, 8)
            tile_t = max(8, min(row_tile, _round_up(pl.cdiv(t_pad, 2), 8)))
            grid = (pl.cdiv(t_pad, tile_t),)

            cos_pad, sin_pad = pl.pallas_call(
                _rope_rowtile_kernel,
                out_shape=(
                    jax.ShapeDtypeStruct((t_pad, d2), out_dtype),
                    jax.ShapeDtypeStruct((t_pad, d2), out_dtype),
                ),
                grid_spec=pltpu.PrefetchScalarGridSpec(
                    num_scalar_prefetch=1,
                    grid=grid,
                    in_specs=[
                        pl.BlockSpec((1, d2), lambda i, off: (0, 0)),      # inv_freq
                    ],
                    out_specs=(
                        pl.BlockSpec((tile_t, d2), lambda i, off: (i, 0)),
                        pl.BlockSpec((tile_t, d2), lambda i, off: (i, 0)),
                    ),
                ),
                compiler_params=pltpu.CompilerParams(
                    dimension_semantics=("parallel",),
                    vmem_limit_bytes=vmem_limit,
                ),
            )(offset_arr, inv_freq_row)
            cos2d = cos_pad[:T]
            sin2d = sin_pad[:T]

        # add the broadcast (1, 1, T, D/2) leading axes, same as PyTorch [None, None]
        return cos2d[None, None, :, :], sin2d[None, None, :, :]

    return forward


if __name__ == "__main__":
    config = {"rope_base": 10000.0, "rope_dim": 32}
    B, H, T, D = 2, 4, 8, config["rope_dim"]

    key = jax.random.PRNGKey(0)
    k1, k2 = jax.random.split(key)
    x = jax.random.normal(k1, (B, H, T, D), dtype=jnp.float32)

    rotary = make_rotary_embedding(config)

    def reference(T_, offset_):
        inv_freq_ref = 1.0 / config["rope_base"] ** (
            jnp.arange(0, D, 2, dtype=jnp.float32) / D
        )
        pos_ref = jnp.arange(offset_, offset_ + T_, dtype=jnp.float32)
        freqs_ref = jnp.einsum("i,j->ij", pos_ref, inv_freq_ref)
        return jnp.cos(freqs_ref)[None, None], jnp.sin(freqs_ref)[None, None]

    # case 1: spec-consistent small shape, offset = 0
    cos, sin = rotary(x, offset=0)
    jax.block_until_ready((cos, sin))
    cos_ref, sin_ref = reference(T, 0)
    assert cos.shape == (1, 1, T, D // 2) and sin.shape == (1, 1, T, D // 2)
    assert jnp.allclose(cos, cos_ref, atol=1e-4)
    assert jnp.allclose(sin, sin_ref, atol=1e-4)

    # case 2: T not a multiple of the per-row packing factor + nonzero offset
    T2 = 100
    x2 = jax.random.normal(k2, (1, 1, T2, D), dtype=jnp.float32)
    cos2, sin2 = rotary(x2, offset=5)
    jax.block_until_ready((cos2, sin2))
    cos2_ref, sin2_ref = reference(T2, 5)
    assert cos2.shape == (1, 1, T2, D // 2) and sin2.shape == (1, 1, T2, D // 2)
    assert jnp.allclose(cos2, cos2_ref, atol=1e-4)
    assert jnp.allclose(sin2, sin2_ref, atol=1e-4)

    print("KERNEL_OK")
</pallas_src>

<mosaic_0001>
module attributes {stable_mosaic.version = 11 : i64} {
  func.func @_rope_lane_dense_kernel(%arg0: i32, %arg1: memref<1xi32, #tpu.memory_space<smem>>, %arg2: memref<2x128xf32, #tpu.memory_space<vmem>>, %arg3: memref<8x128xf32, #tpu.memory_space<vmem>>, %arg4: memref<8x128xf32, #tpu.memory_space<vmem>>) attributes {dimension_semantics = [#tpu.dimension_semantics<parallel>], iteration_bounds = array<i64: 1>, scalar_prefetch = 1 : i64, scratch_operands = 0 : i64, tpu.core_type = #tpu.core_type<tc>, window_params = [{pipeline_mode = #tpu.pipeline_mode<synchronous>, transform_indices = @transform_0, window_bounds = array<i64: 2, 128>}, {transform_indices = @transform_1, window_bounds = array<i64: 8, 128>}, {transform_indices = @transform_2, window_bounds = array<i64: 8, 128>}]} {
    %c8_i32 = arith.constant 8 : i32
    %0 = arith.muli %arg0, %c8_i32 : i32
    %c0 = arith.constant 0 : index
    %1 = memref.load %arg1[%c0] : memref<1xi32, #tpu.memory_space<smem>>
    %2 = tpu.iota {dimensions = array<i32: 0>} : vector<8x128xi32>
    %3 = vector.broadcast %0 : i32 to vector<8x128xi32>
    %4 = arith.addi %2, %3 : vector<8x128xi32>
    %c8_i32_0 = arith.constant 8 : i32
    %5 = vector.broadcast %c8_i32_0 : i32 to vector<8x128xi32>
    %6 = arith.muli %4, %5 : vector<8x128xi32>
    %7 = vector.broadcast %1 : i32 to vector<8x128xi32>
    %8 = arith.addi %6, %7 : vector<8x128xi32>
    %c0_1 = arith.constant 0 : index
    %c0_2 = arith.constant 0 : index
    %9 = vector.load %arg2[%c0_1, %c0_2] : memref<2x128xf32, #tpu.memory_space<vmem>>, vector<1x128xf32>
    %c1 = arith.constant 1 : index
    %c0_3 = arith.constant 0 : index
    %10 = vector.load %arg2[%c1, %c0_3] : memref<2x128xf32, #tpu.memory_space<vmem>>, vector<1x128xf32>
    %11 = arith.sitofp %8 : vector<8x128xi32> to vector<8x128xf32>
    %12 = vector.broadcast %9 : vector<1x128xf32> to vector<8x128xf32>
    %13 = arith.mulf %11, %12 : vector<8x128xf32>
    %14 = vector.broadcast %10 : vector<1x128xf32> to vector<8x128xf32>
    %15 = arith.addf %13, %14 : vector<8x128xf32>
    %16 = math.cos %15 : vector<8x128xf32>
    %c0_4 = arith.constant 0 : index
    %c0_5 = arith.constant 0 : index
    %17 = vector.load %arg3[%c0_4, %c0_5] : memref<8x128xf32, #tpu.memory_space<vmem>>, vector<8x128xf32>
    tpu.vector_store %arg3[%c0_4, %c0_5], %16 {strides = array<i32>} : memref<8x128xf32, #tpu.memory_space<vmem>>, vector<8x128xf32>,
    %18 = math.sin %15 : vector<8x128xf32>
    %c0_6 = arith.constant 0 : index
    %c0_7 = arith.constant 0 : index
    %19 = vector.load %arg4[%c0_6, %c0_7] : memref<8x128xf32, #tpu.memory_space<vmem>>, vector<8x128xf32>
    tpu.vector_store %arg4[%c0_6, %c0_7], %18 {strides = array<i32>} : memref<8x128xf32, #tpu.memory_space<vmem>>, vector<8x128xf32>,
    return
  }
  func.func @transform_0(%arg0: i32, %arg1: memref<1xi32, #tpu.memory_space<smem>>) -> (i32, i32) {
    %c0_i32 = arith.constant 0 : i32
    %c0_i32_0 = arith.constant 0 : i32
    %c0_i32_1 = arith.constant 0 : i32
    return %c0_i32, %c0_i32_0 : i32, i32
  }
  func.func @transform_1(%arg0: i32, %arg1: memref<1xi32, #tpu.memory_space<smem>>) -> (i32, i32) {
    %c0_i32 = arith.constant 0 : i32
    %c0_i32_0 = arith.constant 0 : i32
    return %arg0, %c0_i32 : i32, i32
  }
  func.func @transform_2(%arg0: i32, %arg1: memref<1xi32, #tpu.memory_space<smem>>) -> (i32, i32) {
    %c0_i32 = arith.constant 0 : i32
    %c0_i32_0 = arith.constant 0 : i32
    return %arg0, %c0_i32 : i32, i32
  }
}

</mosaic_0001>

<llo_original>
// kernel: tpu_custom_call.1
$region0: #{tpu_custom_call.1}
  #allocation0 [shape = 'u32[]', space=smem, size = 0x4, offset = 0x4, fixed_abs, tag = 'smem constant byte address 0x4 - core index']
  #allocation1 [shape = 'u32[144,128]{1,0:T(1,128)}', space=vmem, size = 0x12000, scoped, tag = 'internal scratch']
  #allocation2 [shape = 's32[1]{0}', space=sflag, size = 0x4, scoped, tag = 'scoped memory for tpu_custom_call.1']
  #allocation3 [shape = 's32[1]{0:T(128)S(6)}', space=smem, size = 0x200, scoped, tag = 'prefetched SMEM operand 0']
  %s0 = inlined_call_operand.<no memory space> [shape: s32[1], index: 0, kind: input, shape index: {}]
  %s1 = inlined_call_operand.vmem [shape: f32[2,128], index: 1, kind: input, shape index: {}]
  %s2 = inlined_call_operand.hbm [shape: f32[8,128], index: 2, kind: output, shape index: {0}]
  %s3 = inlined_call_operand.hbm [shape: f32[8,128], index: 3, kind: output, shape index: {1}]
  %4 = xla_tuple %s2, %s3
  %s5 = sld [smem:[#allocation0]]
  $region22: #{tpu_custom_call.1} parent=0
    _
  %s7 = ssub.s32 1, %s5
  %s8 = scalar_select 0, %s7, %s5
  %9 = sst [smem:[#allocation3]] %s0
  $region1: #{tpu_custom_call.1} parent=0
    #allocation4 [shape = 'u8[4096]{0}', space=vmem, size = 0x1000, scoped, tag = 'output window, operand 0, single buffered']
    #allocation5 [shape = 's32[1]{0}', space=sflag, size = 0x4, scoped, tag = 'scoped memory for tpu_custom_call.1']
    #allocation6 [shape = 'u8[4096]{0}', space=vmem, size = 0x1000, scoped, tag = 'output window, operand 1, single buffered']
    #allocation7 [shape = 's32[1]{0}', space=sflag, size = 0x4, scoped, tag = 'scoped memory for tpu_custom_call.1']
    %10 = vsyncpa [#allocation5], 0
    %11 = vsyncpa [#allocation7], 0
    // Predicated region
    $region2: #{tpu_custom_call.1} parent=1 // pred_check
      _
    $region3: #{tpu_custom_call.1} parent=1 // pred_check_branch
      %13 = sbr.rel (0) target = $region5
    $region4: #{tpu_custom_call.1} parent=1 // pred_region
      _
    $region5: #{tpu_custom_call.1} parent=1 // pred_fallthru
      _
    %s14 = smul.u32 0, 8
    %s15 = sld [smem:[#allocation3]]
    %v16 = vlaneseq
    %v17 = vshrl.u32 %v16, 7
    %v18 = vstv %s14
    %v19 = vadd.s32 %v17, %v18
    %v20 = vmul.u32 %v19, 8
    %v21 = vstv %s15
    %v22 = vadd.s32 %v20, %v21
    %v23 = vld [vmem:[%s1] sm:$0x1]
    %v24 = vld [vmem:[%s1 + $0x1] sm:$0x1]
    %v25 = vcvt.s32.f32 %v22
    %v26 = vlaneseq
    %v27 = vshrl.u32 %v26, 7
    %v28 = vsub.s32 0, %v27
    %v29 = vrot.slane %v23, %v28
    %v30 = vmul.f32 %v25, %v29
    %v31 = vlaneseq
    %v32 = vshrl.u32 %v31, 7
    %v33 = vsub.s32 0, %v32
    %v34 = vrot.slane %v24, %v33
    %v35 = vadd.f32 %v30, %v34
    %v36 = vand.u32 2147483647, %v35
    %vm37 = vcmp.le.f32.partialorder %v36, 0.7853982
    %vm38 = vcmp.lt.s32.totalorder %v35, 0
    %v39 = vand.u32 %v35, 2139095040
    %v40 = vshrl.u32 %v39, 23
    %v41 = vsub.s32 %v40, 127
    %v42 = vand.u32 2147483647, %v35
    %v43 = vand.u32 %v42, 8388607
    %v44 = vor.u32 %v43, 8388608
    %v45 = vsub.s32 0, %v44
    %v46 = vadd.s32 %v41, 1
    %vm47 = vcmp.gt.s32.totalorder %v46, 0
    %v48 = vsel %vm47, %v46, 0
    %v49 = vshrl.u32 %v48, 5
    %v50 = vand.u32 %v48, 31
    %v51 = vsub.s32 32, %v50
    %v52 = vshrl.u32 683565275, %v51
    %v53 = vshll.u32 683565275, %v50
    %v54 = vshrl.u32 2475754826, %v51
    %v55 = vor.u32 %v53, %v54
    %v56 = vshll.u32 2475754826, %v50
    %v57 = vshrl.u32 2131351028, %v51
    %v58 = vor.u32 %v56, %v57
    %v59 = vshll.u32 2131351028, %v50
    %v60 = vshrl.u32 2102212464, %v51
    %v61 = vor.u32 %v59, %v60
    %v62 = vshll.u32 2102212464, %v50
    %v63 = vshrl.u32 920167782, %v51
    %v64 = vor.u32 %v62, %v63
    %v65 = vshll.u32 920167782, %v50
    %v66 = vshrl.u32 1326507024, %v51
    %v67 = vor.u32 %v65, %v66
    %vm68 = vcmp.lt.s32.totalorder %v49, 1
    %vm69 = vcmp.lt.s32.totalorder %v49, 2
    %vm70 = vcmp.lt.s32.totalorder %v49, 3
    %vm71 = vcmp.lt.s32.totalorder %v49, 4
    %v72 = vsel %vm68, %v52, %v55
    %v73 = vsel %vm71, %v61, 2102212464
    %v74 = vsel %vm70, %v58, %v73
    %v75 = vsel %vm69, %v72, %v74
    %v76 = vsel %vm68, %v55, %v58
    %v77 = vsel %vm71, %v64, 920167782
    %v78 = vsel %vm70, %v61, %v77
    %v79 = vsel %vm69, %v76, %v78
    %v80 = vsel %vm68, %v58, %v61
    %v81 = vsel %vm71, %v67, 1326507024
    %v82 = vsel %vm70, %v64, %v81
    %v83 = vsel %vm69, %v80, %v82
    %v84 = vshll.u32 %v44, 8
    %v85 = vmul.u32.u64.compose %v84, %v83
    %v86 = vextract.low.u32 %v85
    %v87 = vextract.high.u32 %v85
    %v88 = vmul.u32.u64.compose %v84, %v79
    %v89 = vextract.low.u32 %v88
    %v90 = vextract.high.u32 %v88
    %v91 = vmul.u32 %v84, %v75
    %v92 = vadd.s32 %v87, %v89
    %vm93 = vc.u32 %v87, %v89
    %v94 = vadd.s32 %v90, 1
    %v95 = vsel %vm93, %v94, %v90
    %v96 = vadd.s32 %v91, %v95
    %v97 = vadd.s32 %v96, 536870912
    %v98 = vshrl.u32 %v97, 30
    %v99 = vshll.u32 %v98, 30
    %v100 = vsub.s32 %v96, %v99
    %vm101 = vcmp.lt.s32.totalorder %v100, 0
    %v102 = vsub.s32 0, %v100
    %v103 = vsel %vm101, %v102, %v100
    %v104 = vclz %v103
    %v105 = vsub.s32 %v104, 2
    %vm106 = vcmp.gt.s32.totalorder 0, %v105
    %v107 = vsel %vm106, 0, %v105
    %v108 = vsub.s32 32, %v107
    %v109 = vshll.u32 %v100, %v107
    %v110 = vshrl.u32 %v92, %v108
    %v111 = vor.u32 %v109, %v110
    %v112 = vsub.s32 4294967266, %v107
    %v113 = vadd.s32 %v112, 127
    %v114 = vshll.u32 %v113, 23
    %v115 = vor.u32 4788187, %v114
    %v116 = vand.u32 2147483647, %v115
    %v118 = vcvt.s32.f32 %v111
    %v119 = vmul.f32 %v118, %v116
    %v120 = vxor.u32 %v119, 2147483648
    %v121 = vsel %vm38, %v120, %v119
    %v122 = vsub.s32 4, %v98
    %v123 = vsel %vm38, %v122, %v98
    %v124 = vsel %vm37, %v35, %v121
    %v125 = vsel %vm37, 0, %v123
    %v126 = vcosq.f32.pop %v124
    %v127 = vsinq.f32.pop %v124
    %vm128 = vweird.f32 %v35
    %v129 = vand.u32 %v125, 3
    %vm130 = vcmp.lt.s32.totalorder %v129, 2
    %vm131 = vcmp.eq.s32.totalorder %v129, 0
    %v132 = vxor.u32 %v127, 2147483648
    %v133 = vsel %vm131, %v126, %v132
    %vm134 = vcmp.eq.s32.totalorder %v129, 2
    %v135 = vxor.u32 %v126, 2147483648
    %v136 = vsel %vm134, %v135, %v127
    %v137 = vsel %vm130, %v133, %v136
    %v138 = vsel %vm128, nan, %v137
    %139 = vst [vmem:[#allocation4] sm:$0xff] %v138
    %v140 = vand.u32 2147483647, %v35
    %vm141 = vcmp.le.f32.partialorder %v140, 0.7853982
    %vm142 = vcmp.lt.s32.totalorder %v35, 0
    %v143 = vand.u32 %v35, 2139095040
    %v144 = vshrl.u32 %v143, 23
    %v145 = vsub.s32 %v144, 127
    %v146 = vand.u32 2147483647, %v35
    %v147 = vand.u32 %v146, 8388607
    %v148 = vor.u32 %v147, 8388608
    %v149 = vsub.s32 0, %v148
    %v150 = vadd.s32 %v145, 1
    %vm151 = vcmp.gt.s32.totalorder %v150, 0
    %v152 = vsel %vm151, %v150, 0
    %v153 = vshrl.u32 %v152, 5
    %v154 = vand.u32 %v152, 31
    %v155 = vsub.s32 32, %v154
    %v156 = vshrl.u32 683565275, %v155
    %v157 = vshll.u32 683565275, %v154
    %v158 = vshrl.u32 2475754826, %v155
    %v159 = vor.u32 %v157, %v158
    %v160 = vshll.u32 2475754826, %v154
    %v161 = vshrl.u32 2131351028, %v155
    %v162 = vor.u32 %v160, %v161
    %v163 = vshll.u32 2131351028, %v154
    %v164 = vshrl.u32 2102212464, %v155
    %v165 = vor.u32 %v163, %v164
    %v166 = vshll.u32 2102212464, %v154
    %v167 = vshrl.u32 920167782, %v155
    %v168 = vor.u32 %v166, %v167
    %v169 = vshll.u32 920167782, %v154
    %v170 = vshrl.u32 1326507024, %v155
    %v171 = vor.u32 %v169, %v170
    %vm172 = vcmp.lt.s32.totalorder %v153, 1
    %vm173 = vcmp.lt.s32.totalorder %v153, 2
    %vm174 = vcmp.lt.s32.totalorder %v153, 3
    %vm175 = vcmp.lt.s32.totalorder %v153, 4
    %v176 = vsel %vm172, %v156, %v159
    %v177 = vsel %vm175, %v165, 2102212464
    %v178 = vsel %vm174, %v162, %v177
    %v179 = vsel %vm173, %v176, %v178
    %v180 = vsel %vm172, %v159, %v162
    %v181 = vsel %vm175, %v168, 920167782
    %v182 = vsel %vm174, %v165, %v181
    %v183 = vsel %vm173, %v180, %v182
    %v184 = vsel %vm172, %v162, %v165
    %v185 = vsel %vm175, %v171, 1326507024
    %v186 = vsel %vm174, %v168, %v185
    %v187 = vsel %vm173, %v184, %v186
    %v188 = vshll.u32 %v148, 8
    %v189 = vmul.u32.u64.compose %v188, %v187
    %v190 = vextract.low.u32 %v189
    %v191 = vextract.high.u32 %v189
    %v192 = vmul.u32.u64.compose %v188, %v183
    %v193 = vextract.low.u32 %v192
    %v194 = vextract.high.u32 %v192
    %v195 = vmul.u32 %v188, %v179
    %v196 = vadd.s32 %v191, %v193
    %vm197 = vc.u32 %v191, %v193
    %v198 = vadd.s32 %v194, 1
    %v199 = vsel %vm197, %v198, %v194
    %v200 = vadd.s32 %v195, %v199
    %v201 = vadd.s32 %v200, 536870912
    %v202 = vshrl.u32 %v201, 30
    %v203 = vshll.u32 %v202, 30
    %v204 = vsub.s32 %v200, %v203
    %vm205 = vcmp.lt.s32.totalorder %v204, 0
    %v206 = vsub.s32 0, %v204
    %v207 = vsel %vm205, %v206, %v204
    %v208 = vclz %v207
    %v209 = vsub.s32 %v208, 2
    %vm210 = vcmp.gt.s32.totalorder 0, %v209
    %v211 = vsel %vm210, 0, %v209
    %v212 = vsub.s32 32, %v211
    %v213 = vshll.u32 %v204, %v211
    %v214 = vshrl.u32 %v196, %v212
    %v215 = vor.u32 %v213, %v214
    %v216 = vsub.s32 4294967266, %v211
    %v217 = vadd.s32 %v216, 127
    %v218 = vshll.u32 %v217, 23
    %v219 = vor.u32 4788187, %v218
    %v220 = vand.u32 2147483647, %v219
    %v222 = vcvt.s32.f32 %v215
    %v223 = vmul.f32 %v222, %v220
    %v224 = vxor.u32 %v223, 2147483648
    %v225 = vsel %vm142, %v224, %v223
    %v226 = vsub.s32 4, %v202
    %v227 = vsel %vm142, %v226, %v202
    %v228 = vsel %vm141, %v35, %v225
    %v229 = vsel %vm141, 0, %v227
    %v230 = vcosq.f32.pop %v228
    %v231 = vsinq.f32.pop %v228
    %vm232 = vweird.f32 %v35
    %v233 = vadd.s32 %v229, 3
    %v234 = vand.u32 %v233, 3
    %vm235 = vcmp.lt.s32.totalorder %v234, 2
    %vm236 = vcmp.eq.s32.totalorder %v234, 0
    %v237 = vxor.u32 %v231, 2147483648
    %v238 = vsel %vm236, %v230, %v237
    %vm239 = vcmp.eq.s32.totalorder %v234, 2
    %v240 = vxor.u32 %v230, 2147483648
    %v241 = vsel %vm239, %v240, %v231
    %v242 = vsel %vm235, %v238, %v241
    %v243 = vsel %vm232, nan, %v242
    %244 = vst [vmem:[#allocation6] sm:$0xff] %v243
    // Predicated region
    $region6: #{tpu_custom_call.1} parent=1 // pred_check
      _
    $region7: #{tpu_custom_call.1} parent=1 // pred_check_branch
      %246 = sbr.rel (0) target = $region9
    $region8: #{tpu_custom_call.1} parent=1 // pred_region
      %s248 = ssub.s32 128, 128
      %249 = vsyncadd [#allocation5], %s248
      %s251 = sshll.u32 [#allocation4], 4
      %s252 = int_to_ptr.vmem [resolvable:$true] %s251
      %254 = dma.vmem_to_hbm [thread:$0]  %s252, 128, %s2, [#allocation5]
    $region9: #{tpu_custom_call.1} parent=1 // pred_fallthru
      _
    // Predicated region
    $region10: #{tpu_custom_call.1} parent=1 // pred_check
      _
    $region11: #{tpu_custom_call.1} parent=1 // pred_check_branch
      %256 = sbr.rel (0) target = $region13
    $region12: #{tpu_custom_call.1} parent=1 // pred_region
      %s258 = ssub.s32 128, 128
      %259 = vsyncadd [#allocation7], %s258
      %s261 = sshll.u32 [#allocation6], 4
      %s262 = int_to_ptr.vmem [resolvable:$true] %s261
      %264 = dma.vmem_to_hbm [thread:$0]  %s262, 128, %s3, [#allocation7]
    $region13: #{tpu_custom_call.1} parent=1 // pred_fallthru
      _
    // Predicated region
    $region14: #{tpu_custom_call.1} parent=1 // pred_check
      _
    $region15: #{tpu_custom_call.1} parent=1 // pred_check_branch
      %266 = sbr.rel (0) target = $region17
    $region16: #{tpu_custom_call.1} parent=1 // pred_region
      %267 = dma.done [#allocation5], 128
    $region17: #{tpu_custom_call.1} parent=1 // pred_fallthru
      _
    // Predicated region
    $region18: #{tpu_custom_call.1} parent=1 // pred_check
      _
    $region19: #{tpu_custom_call.1} parent=1 // pred_check_branch
      %269 = sbr.rel (0) target = $region21
    $region20: #{tpu_custom_call.1} parent=1 // pred_region
      %270 = dma.done [#allocation7], 128
    $region21: #{tpu_custom_call.1} parent=1 // pred_fallthru
      _
    %271 = vsyncpa [#allocation5], 1
    %272 = vsyncpa [#allocation7], 1

</llo_original>
